<compile_context>
chip_gen: v7x
topology: tpu7x:2x2x1
jax: 0.10.0
libtpu: 0.0.40
codegen_flags: <defaults>
</compile_context>

<pallas_src>
import jax
import jax.numpy as jnp
from jax.experimental import pallas as pl
from jax.experimental.pallas import tpu as pltpu

_LANE = 128  # lane width the padded regression weight is stored at


def _head_kernel(x_ref, w1_ref, b1_ref, w2_ref, b2_ref, w3_ref, b3_ref, o_ref):
    out_features = o_ref.shape[1]
    # Linear -> ReLU  (bf16 MXU operands, f32 accumulation, f32 bias/activation)
    h = jnp.dot(x_ref[...], w1_ref[...], preferred_element_type=jnp.float32)
    h = jnp.maximum(h + b1_ref[...], 0.0).astype(w2_ref.dtype)
    # Linear -> ReLU
    h = jnp.dot(h, w2_ref[...], preferred_element_type=jnp.float32)
    h = jnp.maximum(h + b2_ref[...], 0.0).astype(w3_ref.dtype)
    # Regression Linear (weight lane-padded to 128) -> keep real columns -> Sigmoid
    logits = jnp.dot(h, w3_ref[...], preferred_element_type=jnp.float32)
    logits = logits[:, :out_features] + b3_ref[...]
    o_ref[...] = jax.nn.sigmoid(logits).astype(o_ref.dtype)


def prepare_params(w1, b1, w2, b2, w3, b3):
    """One-time parameter prep (do at model init, NOT per forward call):
    bf16 casts for the MXU, (1, N) bias reshapes, and zero-padding of the
    2-wide regression weight to a full 128-lane slab."""
    hidden, out_features = w3.shape
    w3p = (jnp.zeros((hidden, _LANE), jnp.float32)
           .at[:, :out_features].set(w3.astype(jnp.float32))
           .astype(jnp.bfloat16))
    return (w1.astype(jnp.bfloat16),
            b1.reshape(1, -1).astype(jnp.float32),
            w2.astype(jnp.bfloat16),
            b2.reshape(1, -1).astype(jnp.float32),
            w3p,
            b3.reshape(1, -1).astype(jnp.float32))


def dhm_regression_head(x, params, *, tb=None):
    """Pallas forward pass of DHMRegressionHead.

    x:      (B, neck_output) float32 or bfloat16
    params: tuple from prepare_params()
    returns (B, 2) float32
    """
    w1, b1, w2, b2, w3p, b3 = params
    B, F = x.shape
    H = w1.shape[1]
    OUT = b3.shape[1]

    if tb is None:
        # Largest batch tile up to 2048 rows, but keep >=2 grid steps when
        # possible so the "parallel" axis can shard across v7x's two
        # TensorCores; rows rounded up to the 8-row sublane tile.
        half = pl.cdiv(B, 2)
        tb = min(2048, max(8, ((half + 7) // 8) * 8))

    grid_b = pl.cdiv(B, tb)
    b_padded = grid_b * tb

    # bf16 input stream to the MXU.  In production, feed bf16 straight from
    # the upstream neck to avoid this extra cast pass over x.
    xb = x.astype(jnp.bfloat16)
    if b_padded != B:
        xb = jnp.pad(xb, ((0, b_padded - B), (0, 0)))

    out = pl.pallas_call(
        _head_kernel,
        out_shape=jax.ShapeDtypeStruct((b_padded, OUT), jnp.float32),
        grid_spec=pltpu.PrefetchScalarGridSpec(
            num_scalar_prefetch=0,
            grid=(grid_b,),
            in_specs=[
                pl.BlockSpec((tb, F), lambda i: (i, 0)),      # x tile   (bf16)
                pl.BlockSpec((F, H), lambda i: (0, 0)),       # w1       (bf16)
                pl.BlockSpec((1, H), lambda i: (0, 0)),       # b1       (f32)
                pl.BlockSpec((H, H), lambda i: (0, 0)),       # w2       (bf16)
                pl.BlockSpec((1, H), lambda i: (0, 0)),       # b2       (f32)
                pl.BlockSpec((H, _LANE), lambda i: (0, 0)),   # w3 padded(bf16)
                pl.BlockSpec((1, OUT), lambda i: (0, 0)),     # b3       (f32)
            ],
            out_specs=pl.BlockSpec((tb, OUT), lambda i: (i, 0)),
        ),
        compiler_params=pltpu.CompilerParams(
            dimension_semantics=("parallel",)),
    )(xb, w1, b1, w2, b2, w3p, b3)

    return out[:B] if b_padded != B else out


def _ref_forward(x, w1, b1, w2, b2, w3, b3):
    h = jnp.maximum(x @ w1 + b1, 0.0)
    h = jnp.maximum(h @ w2 + b2, 0.0)
    return jax.nn.sigmoid(h @ w3 + b3)


def _init_linear(key, fan_in, fan_out):
    # Deterministic init mimicking PyTorch Linear default: U(-1/sqrt(in), 1/sqrt(in)).
    kw, kb = jax.random.split(key)
    bound = 1.0 / jnp.sqrt(jnp.float32(fan_in))
    w = jax.random.uniform(kw, (fan_in, fan_out), jnp.float32, -bound, bound)
    b = jax.random.uniform(kb, (fan_out,), jnp.float32, -bound, bound)
    return w, b


if __name__ == "__main__":
    B = 16            # batch
    NECK_OUT = 32     # neck_output
    HIDDEN = 32       # hidden_size

    key = jax.random.PRNGKey(0)
    kx, k1, k2, k3 = jax.random.split(key, 4)

    x = jax.random.normal(kx, (B, NECK_OUT), jnp.float32)
    w1, b1 = _init_linear(k1, NECK_OUT, HIDDEN)
    w2, b2 = _init_linear(k2, HIDDEN, HIDDEN)
    w3, b3 = _init_linear(k3, HIDDEN, 2)

    params = prepare_params(w1, b1, w2, b2, w3, b3)   # one-time prep (hoisted)
    fwd = jax.jit(dhm_regression_head)
    out = jax.block_until_ready(fwd(x, params))

    ref = _ref_forward(x, w1, b1, w2, b2, w3, b3)
    assert out.shape == (B, 2), out.shape
    # bf16 MXU operands with f32 accumulation -> compare to f32 reference with
    # a loose-but-safe tolerance (sigmoid output, K=32 reductions).
    max_err = jnp.max(jnp.abs(out - ref))
    assert jnp.allclose(out, ref, atol=2e-2), f"mismatch vs reference: {max_err}"

    print("KERNEL_OK")
</pallas_src>

<mosaic_0001>
module attributes {stable_mosaic.version = 11 : i64} {
  func.func @_head_kernel(%arg0: i32, %arg1: memref<8x32xbf16, #tpu.memory_space<vmem>>, %arg2: memref<32x32xbf16, #tpu.memory_space<vmem>>, %arg3: memref<1x32xf32, #tpu.memory_space<vmem>>, %arg4: memref<32x32xbf16, #tpu.memory_space<vmem>>, %arg5: memref<1x32xf32, #tpu.memory_space<vmem>>, %arg6: memref<32x128xbf16, #tpu.memory_space<vmem>>, %arg7: memref<1x2xf32, #tpu.memory_space<vmem>>, %arg8: memref<8x2xf32, #tpu.memory_space<vmem>>) attributes {dimension_semantics = [#tpu.dimension_semantics<parallel>], iteration_bounds = array<i64: 2>, scalar_prefetch = 0 : i64, scratch_operands = 0 : i64, tpu.core_type = #tpu.core_type<tc>, window_params = [{transform_indices = @transform_0, window_bounds = array<i64: 8, 32>}, {pipeline_mode = #tpu.pipeline_mode<synchronous>, transform_indices = @transform_1, window_bounds = array<i64: 32, 32>}, {pipeline_mode = #tpu.pipeline_mode<synchronous>, transform_indices = @transform_2, window_bounds = array<i64: 1, 32>}, {pipeline_mode = #tpu.pipeline_mode<synchronous>, transform_indices = @transform_3, window_bounds = array<i64: 32, 32>}, {pipeline_mode = #tpu.pipeline_mode<synchronous>, transform_indices = @transform_4, window_bounds = array<i64: 1, 32>}, {pipeline_mode = #tpu.pipeline_mode<synchronous>, transform_indices = @transform_5, window_bounds = array<i64: 32, 128>}, {pipeline_mode = #tpu.pipeline_mode<synchronous>, transform_indices = @transform_6, window_bounds = array<i64: 1, 2>}, {transform_indices = @transform_7, window_bounds = array<i64: 8, 2>}]} {
    %c0 = arith.constant 0 : index
    %c0_0 = arith.constant 0 : index
    %0 = vector.load %arg1[%c0, %c0_0] : memref<8x32xbf16, #tpu.memory_space<vmem>>, vector<8x32xbf16>
    %c0_1 = arith.constant 0 : index
    %c0_2 = arith.constant 0 : index
    %1 = vector.load %arg2[%c0_1, %c0_2] : memref<32x32xbf16, #tpu.memory_space<vmem>>, vector<32x32xbf16>
    %cst = arith.constant dense<0.000000e+00> : vector<8x32xf32>
    %2 = tpu.matmul %0, %1, %cst {dimension_numbers = #tpu.dot_dimension_numbers<[1], [0], [0], [1], [0, 0, 1, 1], [], []>} : vector<8x32xbf16>, vector<32x32xbf16>, vector<8x32xf32> -> vector<8x32xf32>
    %c0_3 = arith.constant 0 : index
    %c0_4 = arith.constant 0 : index
    %3 = vector.load %arg3[%c0_3, %c0_4] : memref<1x32xf32, #tpu.memory_space<vmem>>, vector<1x32xf32>
    %4 = vector.broadcast %3 : vector<1x32xf32> to vector<8x32xf32>
    %5 = arith.addf %2, %4 : vector<8x32xf32>
    %cst_5 = arith.constant 0.000000e+00 : f32
    %6 = vector.broadcast %cst_5 : f32 to vector<8x32xf32>
    %7 = arith.maximumf %5, %6 : vector<8x32xf32>
    %8 = arith.truncf %7 : vector<8x32xf32> to vector<8x32xbf16>
    %c0_6 = arith.constant 0 : index
    %c0_7 = arith.constant 0 : index
    %9 = vector.load %arg4[%c0_6, %c0_7] : memref<32x32xbf16, #tpu.memory_space<vmem>>, vector<32x32xbf16>
    %cst_8 = arith.constant dense<0.000000e+00> : vector<8x32xf32>
    %10 = tpu.matmul %8, %9, %cst_8 {dimension_numbers = #tpu.dot_dimension_numbers<[1], [0], [0], [1], [0, 0, 1, 1], [], []>} : vector<8x32xbf16>, vector<32x32xbf16>, vector<8x32xf32> -> vector<8x32xf32>
    %c0_9 = arith.constant 0 : index
    %c0_10 = arith.constant 0 : index
    %11 = vector.load %arg5[%c0_9, %c0_10] : memref<1x32xf32, #tpu.memory_space<vmem>>, vector<1x32xf32>
    %12 = vector.broadcast %11 : vector<1x32xf32> to vector<8x32xf32>
    %13 = arith.addf %10, %12 : vector<8x32xf32>
    %cst_11 = arith.constant 0.000000e+00 : f32
    %14 = vector.broadcast %cst_11 : f32 to vector<8x32xf32>
    %15 = arith.maximumf %13, %14 : vector<8x32xf32>
    %16 = arith.truncf %15 : vector<8x32xf32> to vector<8x32xbf16>
    %c0_12 = arith.constant 0 : index
    %c0_13 = arith.constant 0 : index
    %17 = vector.load %arg6[%c0_12, %c0_13] : memref<32x128xbf16, #tpu.memory_space<vmem>>, vector<32x128xbf16>
    %cst_14 = arith.constant dense<0.000000e+00> : vector<8x128xf32>
    %18 = tpu.matmul %16, %17, %cst_14 {dimension_numbers = #tpu.dot_dimension_numbers<[1], [0], [0], [1], [0, 0, 1, 1], [], []>} : vector<8x32xbf16>, vector<32x128xbf16>, vector<8x128xf32> -> vector<8x128xf32>
    %19 = vector.extract_strided_slice %18 {offsets = [0, 0], sizes = [8, 2], strides = [1, 1]} : vector<8x128xf32> to vector<8x2xf32>
    %c0_15 = arith.constant 0 : index
    %c0_16 = arith.constant 0 : index
    %20 = vector.load %arg7[%c0_15, %c0_16] : memref<1x2xf32, #tpu.memory_space<vmem>>, vector<1x2xf32>
    %21 = vector.broadcast %20 : vector<1x2xf32> to vector<8x2xf32>
    %22 = arith.addf %19, %21 : vector<8x2xf32>
    %23 = arith.negf %22 : vector<8x2xf32>
    %24 = math.exp %23 : vector<8x2xf32>
    %cst_17 = arith.constant 1.000000e+00 : f32
    %25 = vector.broadcast %cst_17 : f32 to vector<8x2xf32>
    %26 = arith.addf %25, %24 : vector<8x2xf32>
    %27 = arith.divf %25, %26 : vector<8x2xf32>
    %c0_18 = arith.constant 0 : index
    %c0_19 = arith.constant 0 : index
    %28 = vector.load %arg8[%c0_18, %c0_19] : memref<8x2xf32, #tpu.memory_space<vmem>>, vector<8x2xf32>
    tpu.vector_store %arg8[%c0_18, %c0_19], %27 {strides = array<i32>} : memref<8x2xf32, #tpu.memory_space<vmem>>, vector<8x2xf32>,
    return
  }
  func.func @transform_0(%arg0: i32) -> (i32, i32) {
    %c0_i32 = arith.constant 0 : i32
    %c0_i32_0 = arith.constant 0 : i32
    return %arg0, %c0_i32 : i32, i32
  }
  func.func @transform_1(%arg0: i32) -> (i32, i32) {
    %c0_i32 = arith.constant 0 : i32
    %c0_i32_0 = arith.constant 0 : i32
    %c0_i32_1 = arith.constant 0 : i32
    return %c0_i32, %c0_i32_0 : i32, i32
  }
  func.func @transform_2(%arg0: i32) -> (i32, i32) {
    %c0_i32 = arith.constant 0 : i32
    %c0_i32_0 = arith.constant 0 : i32
    %c0_i32_1 = arith.constant 0 : i32
    return %c0_i32, %c0_i32_0 : i32, i32
  }
  func.func @transform_3(%arg0: i32) -> (i32, i32) {
    %c0_i32 = arith.constant 0 : i32
    %c0_i32_0 = arith.constant 0 : i32
    %c0_i32_1 = arith.constant 0 : i32
    return %c0_i32, %c0_i32_0 : i32, i32
  }
  func.func @transform_4(%arg0: i32) -> (i32, i32) {
    %c0_i32 = arith.constant 0 : i32
    %c0_i32_0 = arith.constant 0 : i32
    %c0_i32_1 = arith.constant 0 : i32
    return %c0_i32, %c0_i32_0 : i32, i32
  }
  func.func @transform_5(%arg0: i32) -> (i32, i32) {
    %c0_i32 = arith.constant 0 : i32
    %c0_i32_0 = arith.constant 0 : i32
    %c0_i32_1 = arith.constant 0 : i32
    return %c0_i32, %c0_i32_0 : i32, i32
  }
  func.func @transform_6(%arg0: i32) -> (i32, i32) {
    %c0_i32 = arith.constant 0 : i32
    %c0_i32_0 = arith.constant 0 : i32
    %c0_i32_1 = arith.constant 0 : i32
    return %c0_i32, %c0_i32_0 : i32, i32
  }
  func.func @transform_7(%arg0: i32) -> (i32, i32) {
    %c0_i32 = arith.constant 0 : i32
    %c0_i32_0 = arith.constant 0 : i32
    return %arg0, %c0_i32 : i32, i32
  }
}

</mosaic_0001>

<llo_original>
// kernel: dhm_regression_head.1
$region0: #{dhm_regression_head.1}
  #allocation0 [shape = 'u32[]', space=smem, size = 0x4, offset = 0x4, fixed_abs, tag = 'smem constant byte address 0x4 - core index']
  #allocation1 [shape = 'u32[144,128]{1,0:T(1,128)}', space=vmem, size = 0x12000, scoped, tag = 'internal scratch']
  %s0 = inlined_call_operand.vmem [shape: bf16[16,32], index: 0, kind: input, shape index: {}]
  %s1 = inlined_call_operand.vmem [shape: bf16[32,32], index: 1, kind: input, shape index: {}]
  %s2 = inlined_call_operand.vmem [shape: f32[1,32], index: 2, kind: input, shape index: {}]
  %s3 = inlined_call_operand.vmem [shape: bf16[32,32], index: 3, kind: input, shape index: {}]
  %s4 = inlined_call_operand.vmem [shape: f32[1,32], index: 4, kind: input, shape index: {}]
  %s5 = inlined_call_operand.hbm [shape: bf16[32,128], index: 5, kind: input, shape index: {}]
  %s6 = inlined_call_operand.vmem [shape: f32[1,2], index: 6, kind: input, shape index: {}]
  %s7 = inlined_call_operand.vmem [shape: f32[16,2], index: 7, kind: output, shape index: {}]
  %s8 = sld [smem:[#allocation0]]
  $region65: #{dhm_regression_head.1} parent=0
    _
  %s10 = ssub.s32 1, %s8
  %s11 = scalar_select 0, %s10, %s8
  $region1: #{dhm_regression_head.1} parent=0
    #allocation2 [shape = 'u8[8192]{0}', space=vmem, size = 0x2000, scoped, tag = 'input window, operand 5, single buffered']
    #allocation3 [shape = 's32[2]{0}', space=sflag, size = 0x8, scoped, tag = 'scoped memory for dhm_regression_head.1']
    %12 = vsyncpa [#allocation3], 0
    loop: start=0, step=1, limit=4
    $region2: #{dhm_regression_head.1} parent=1 // loop_pre_header
      _
    $region3: #{dhm_regression_head.1} parent=1 // loop_header
      %s14 = sphi 0, %s18
      %p15 = scmp.ge.s32.totalorder %s14, 4
      %s24 = sphi 0, %s26
      %s27 = sphi 0, %s24
      %s28 = sphi 0, %s27
      %s44 = sphi 0, %s28
      %s48 = sphi 0, %s48
      %s50 = sphi 0, %s48
      %s51 = sphi 0, %s50
      %s65 = sphi 0, %s51
      %s69 = sphi 0, %s69
      %s71 = sphi 0, %s69
      %s72 = sphi 0, %s71
      %s86 = sphi 0, %s72
      %s90 = sphi 0, %s90
      %s92 = sphi 0, %s90
      %s93 = sphi 0, %s92
      %s107 = sphi 0, %s93
      %s111 = sphi 0, %s111
      %s113 = sphi 0, %s111
      %s114 = sphi 0, %s113
      %s128 = sphi 0, %s114
      %s132 = sphi 0, %s132
      %s134 = sphi 0, %s132
      %s135 = sphi 0, %s134
      %s149 = sphi 0, %s135
      %s153 = sphi 0, %s153
      %s155 = sphi 0, %s153
      %s156 = sphi 0, %s155
      %s170 = sphi 0, %s156
      %s176 = sphi 0, %s178
      %s179 = sphi 0, %s176
      %s180 = sphi 0, %s179
      %s196 = sphi 0, %s180
    $region4: #{dhm_regression_head.1} parent=1 // loop_header_branch
      %17 = sbr.rel (%p15) target = $region8
    $region5: #{dhm_regression_head.1} parent=1 // loop_body
      %s19 = ssub.s32 %s14, 1
      %s20 = ssub.s32 %s14, 2
      %s21 = sadd.s32 %s14, 1
      %s22 = ssub.s32 %s14, %s21
      %p23 = scmp.eq.s32.totalorder %s22, 0
      %s25 = sadd.s32 %s24, 1
      %s26 = scalar_select %p23, %s24, %s25
      %p29 = pneg %p23
      %p30 = scmp.eq.s32.totalorder %s14, 1
      %p31 = por %p29, %p30
      %p32 = scmp.ne.s32.totalorder %s24, %s27
      %p33 = scmp.eq.s32.totalorder %s14, 0
      %p34 = por %p32, %p33
      %p35 = scmp.ne.s32.totalorder %s24, %s27
      %p36 = scmp.eq.s32.totalorder %s19, 1
      %p37 = por %p35, %p36
      %p38 = scmp.ne.s32.totalorder %s27, %s28
      %p39 = scmp.eq.s32.totalorder %s19, 0
      %p40 = por %p38, %p39
      %p41 = scmp.ne.s32.totalorder %s27, %s28
      %p42 = scmp.eq.s32.totalorder %s20, 1
      %p43 = por %p41, %p42
      %p45 = scmp.ne.s32.totalorder %s28, %s44
      %p46 = scmp.eq.s32.totalorder %s20, 0
      %p47 = por %p45, %p46
      %s49 = sadd.s32 %s48, 1
      %p52 = scmp.eq.s32.totalorder %s14, 1
      %p53 = scmp.ne.s32.totalorder %s48, %s50
      %p54 = scmp.eq.s32.totalorder %s14, 0
      %p55 = por %p53, %p54
      %p56 = scmp.ne.s32.totalorder %s48, %s50
      %p57 = scmp.eq.s32.totalorder %s19, 1
      %p58 = por %p56, %p57
      %p59 = scmp.ne.s32.totalorder %s50, %s51
      %p60 = scmp.eq.s32.totalorder %s19, 0
      %p61 = por %p59, %p60
      %p62 = scmp.ne.s32.totalorder %s50, %s51
      %p63 = scmp.eq.s32.totalorder %s20, 1
      %p64 = por %p62, %p63
      %p66 = scmp.ne.s32.totalorder %s51, %s65
      %p67 = scmp.eq.s32.totalorder %s20, 0
      %p68 = por %p66, %p67
      %s70 = sadd.s32 %s69, 1
      %p73 = scmp.eq.s32.totalorder %s14, 1
      %p74 = scmp.ne.s32.totalorder %s69, %s71
      %p75 = scmp.eq.s32.totalorder %s14, 0
      %p76 = por %p74, %p75
      %p77 = scmp.ne.s32.totalorder %s69, %s71
      %p78 = scmp.eq.s32.totalorder %s19, 1
      %p79 = por %p77, %p78
      %p80 = scmp.ne.s32.totalorder %s71, %s72
      %p81 = scmp.eq.s32.totalorder %s19, 0
      %p82 = por %p80, %p81
      %p83 = scmp.ne.s32.totalorder %s71, %s72
      %p84 = scmp.eq.s32.totalorder %s20, 1
      %p85 = por %p83, %p84
      %p87 = scmp.ne.s32.totalorder %s72, %s86
      %p88 = scmp.eq.s32.totalorder %s20, 0
      %p89 = por %p87, %p88
      %s91 = sadd.s32 %s90, 1
      %p94 = scmp.eq.s32.totalorder %s14, 1
      %p95 = scmp.ne.s32.totalorder %s90, %s92
      %p96 = scmp.eq.s32.totalorder %s14, 0
      %p97 = por %p95, %p96
      %p98 = scmp.ne.s32.totalorder %s90, %s92
      %p99 = scmp.eq.s32.totalorder %s19, 1
      %p100 = por %p98, %p99
      %p101 = scmp.ne.s32.totalorder %s92, %s93
      %p102 = scmp.eq.s32.totalorder %s19, 0
      %p103 = por %p101, %p102
      %p104 = scmp.ne.s32.totalorder %s92, %s93
      %p105 = scmp.eq.s32.totalorder %s20, 1
      %p106 = por %p104, %p105
      %p108 = scmp.ne.s32.totalorder %s93, %s107
      %p109 = scmp.eq.s32.totalorder %s20, 0
      %p110 = por %p108, %p109
      %s112 = sadd.s32 %s111, 1
      %p115 = scmp.eq.s32.totalorder %s14, 1
      %p116 = scmp.ne.s32.totalorder %s111, %s113
      %p117 = scmp.eq.s32.totalorder %s14, 0
      %p118 = por %p116, %p117
      %p119 = scmp.ne.s32.totalorder %s111, %s113
      %p120 = scmp.eq.s32.totalorder %s19, 1
      %p121 = por %p119, %p120
      %p122 = scmp.ne.s32.totalorder %s113, %s114
      %p123 = scmp.eq.s32.totalorder %s19, 0
      %p124 = por %p122, %p123
      %p125 = scmp.ne.s32.totalorder %s113, %s114
      %p126 = scmp.eq.s32.totalorder %s20, 1
      %p127 = por %p125, %p126
      %p129 = scmp.ne.s32.totalorder %s114, %s128
      %p130 = scmp.eq.s32.totalorder %s20, 0
      %p131 = por %p129, %p130
      %s133 = sadd.s32 %s132, 1
      %p136 = scmp.eq.s32.totalorder %s14, 1
      %p137 = scmp.ne.s32.totalorder %s132, %s134
      %p138 = scmp.eq.s32.totalorder %s14, 0
      %p139 = por %p137, %p138
      %p140 = scmp.ne.s32.totalorder %s132, %s134
      %p141 = scmp.eq.s32.totalorder %s19, 1
      %p142 = por %p140, %p141
      %p143 = scmp.ne.s32.totalorder %s134, %s135
      %p144 = scmp.eq.s32.totalorder %s19, 0
      %p145 = por %p143, %p144
      %p146 = scmp.ne.s32.totalorder %s134, %s135
      %p147 = scmp.eq.s32.totalorder %s20, 1
      %p148 = por %p146, %p147
      %p150 = scmp.ne.s32.totalorder %s135, %s149
      %p151 = scmp.eq.s32.totalorder %s20, 0
      %p152 = por %p150, %p151
      %s154 = sadd.s32 %s153, 1
      %p157 = scmp.eq.s32.totalorder %s14, 1
      %p158 = scmp.ne.s32.totalorder %s153, %s155
      %p159 = scmp.eq.s32.totalorder %s14, 0
      %p160 = por %p158, %p159
      %p161 = scmp.ne.s32.totalorder %s153, %s155
      %p162 = scmp.eq.s32.totalorder %s19, 1
      %p163 = por %p161, %p162
      %p164 = scmp.ne.s32.totalorder %s155, %s156
      %p165 = scmp.eq.s32.totalorder %s19, 0
      %p166 = por %p164, %p165
      %p167 = scmp.ne.s32.totalorder %s155, %s156
      %p168 = scmp.eq.s32.totalorder %s20, 1
      %p169 = por %p167, %p168
      %p171 = scmp.ne.s32.totalorder %s156, %s170
      %p172 = scmp.eq.s32.totalorder %s20, 0
      %p173 = por %p171, %p172
      %s174 = ssub.s32 %s14, %s21
      %p175 = scmp.eq.s32.totalorder %s174, 0
      %s177 = sadd.s32 %s176, 1
      %s178 = scalar_select %p175, %s176, %s177
      %p181 = pneg %p175
      %p182 = scmp.eq.s32.totalorder %s14, 1
      %p183 = por %p181, %p182
      %p184 = scmp.ne.s32.totalorder %s176, %s179
      %p185 = scmp.eq.s32.totalorder %s14, 0
      %p186 = por %p184, %p185
      %p187 = scmp.ne.s32.totalorder %s176, %s179
      %p188 = scmp.eq.s32.totalorder %s19, 1
      %p189 = por %p187, %p188
      %p190 = scmp.ne.s32.totalorder %s179, %s180
      %p191 = scmp.eq.s32.totalorder %s19, 0
      %p192 = por %p190, %p191
      %p193 = scmp.ne.s32.totalorder %s179, %s180
      %p194 = scmp.eq.s32.totalorder %s20, 1
      %p195 = por %p193, %p194
      %p197 = scmp.ne.s32.totalorder %s180, %s196
      %p198 = scmp.eq.s32.totalorder %s20, 0
      %p199 = por %p197, %p198
      %p200 = scmp.le.s32.totalorder 1, %s14
      %p201 = scmp.lt.s32.totalorder %s14, 3
      %p202 = pnand %p200, %p201
      %p203 = pneg %p202
      // Predicated region
      $region9: #{dhm_regression_head.1} parent=5 // pred_check
        _
      $region10: #{dhm_regression_head.1} parent=5 // pred_check_branch
        %205 = sbr.rel (%p202) target = $region12
      $region11: #{dhm_regression_head.1} parent=5 // pred_region
        %s206 = ssub.s32 %s14, 1
        // Predicated region
        $region13: #{dhm_regression_head.1} parent=11 // pred_check
          %p207 = pneg %p61
        $region14: #{dhm_regression_head.1} parent=11 // pred_check_branch
          %209 = sbr.rel (%p207) target = $region16
        $region15: #{dhm_regression_head.1} parent=11 // pred_region
          _
        $region16: #{dhm_regression_head.1} parent=11 // pred_fallthru
          _
        // Predicated region
        $region17: #{dhm_regression_head.1} parent=11 // pred_check
          %p210 = pneg %p82
        $region18: #{dhm_regression_head.1} parent=11 // pred_check_branch
          %212 = sbr.rel (%p210) target = $region20
        $region19: #{dhm_regression_head.1} parent=11 // pred_region
          _
        $region20: #{dhm_regression_head.1} parent=11 // pred_fallthru
          _
        // Predicated region
        $region21: #{dhm_regression_head.1} parent=11 // pred_check
          %p213 = pneg %p103
        $region22: #{dhm_regression_head.1} parent=11 // pred_check_branch
          %215 = sbr.rel (%p213) target = $region24
        $region23: #{dhm_regression_head.1} parent=11 // pred_region
          _
        $region24: #{dhm_regression_head.1} parent=11 // pred_fallthru
          _
        // Predicated region
        $region25: #{dhm_regression_head.1} parent=11 // pred_check
          %p216 = pneg %p124
        $region26: #{dhm_regression_head.1} parent=11 // pred_check_branch
          %218 = sbr.rel (%p216) target = $region28
        $region27: #{dhm_regression_head.1} parent=11 // pred_region
          _
        $region28: #{dhm_regression_head.1} parent=11 // pred_fallthru
          _
        // Predicated region
        $region29: #{dhm_regression_head.1} parent=11 // pred_check
          %p219 = pneg %p145
        $region30: #{dhm_regression_head.1} parent=11 // pred_check_branch
          %221 = sbr.rel (%p219) target = $region32
        $region31: #{dhm_regression_head.1} parent=11 // pred_region
          %s223 = ssub.s32 256, 256
          %224 = vsyncadd [#allocation3], %s223
          %s225 = sshll.u32 [#allocation2], 4
          %s226 = int_to_ptr.vmem [resolvable:$true] %s225
          %231 = dma.hbm_to_vmem [thread:$0]  %s5, 256, %s226, [#allocation3], 64, 64, 4
        $region32: #{dhm_regression_head.1} parent=11 // pred_fallthru
          _
        // Predicated region
        $region33: #{dhm_regression_head.1} parent=11 // pred_check
          %p232 = pneg %p166
        $region34: #{dhm_regression_head.1} parent=11 // pred_check_branch
          %234 = sbr.rel (%p232) target = $region36
        $region35: #{dhm_regression_head.1} parent=11 // pred_region
          _
        $region36: #{dhm_regression_head.1} parent=11 // pred_fallthru
          _
      $region12: #{dhm_regression_head.1} parent=5 // pred_fallthru
        _
      %p235 = scmp.lt.s32.totalorder %s14, 2
      // Predicated region
      $region37: #{dhm_regression_head.1} parent=5 // pred_check
        %p236 = pneg %p235
      $region38: #{dhm_regression_head.1} parent=5 // pred_check_branch
        %238 = sbr.rel (%p236) target = $region40
      $region39: #{dhm_regression_head.1} parent=5 // pred_region
        // Predicated region
        $region41: #{dhm_regression_head.1} parent=39 // pred_check
          %p239 = pneg %p34
        $region42: #{dhm_regression_head.1} parent=39 // pred_check_branch
          %241 = sbr.rel (%p239) target = $region44
        $region43: #{dhm_regression_head.1} parent=39 // pred_region
          %p242 = scmp.lt.s32.totalorder %s14, 1
          %s243 = scalar_select %p242, %s14, 1
          %s244 = smul.addr %s243, 4
          %s245 = scalar_lea.vmem %s0, %s244
        $region44: #{dhm_regression_head.1} parent=39 // pred_fallthru
          _
      $region40: #{dhm_regression_head.1} parent=5 // pred_fallthru
        _
      %p246 = scmp.le.s32.totalorder 1, %s14
      %p247 = scmp.lt.s32.totalorder %s14, 3
      %p248 = pnand %p246, %p247
      %p249 = pneg %p248
      // Predicated region
      $region45: #{dhm_regression_head.1} parent=5 // pred_check
        _
      $region46: #{dhm_regression_head.1} parent=5 // pred_check_branch
        %251 = sbr.rel (%p248) target = $region48
      $region47: #{dhm_regression_head.1} parent=5 // pred_region
        %s252 = ssub.s32 %s14, 1
        // Predicated region
        $region49: #{dhm_regression_head.1} parent=47 // pred_check
          %p253 = pneg %p145
        $region50: #{dhm_regression_head.1} parent=47 // pred_check_branch
          %255 = sbr.rel (%p253) target = $region52
        $region51: #{dhm_regression_head.1} parent=47 // pred_region
          %256 = dma.done [#allocation3], 256
        $region52: #{dhm_regression_head.1} parent=47 // pred_fallthru
          _
        %p257 = scmp.lt.s32.totalorder %s19, 1
        %s258 = scalar_select %p257, %s19, 1
        %s259 = smul.addr %s258, 4
        %s260 = scalar_lea.vmem %s0, %s259
        %p261 = pneg %p40
        %p262 = pneg %p37
        %p263 = pneg %p61
        %p264 = pneg %p58
        %p265 = pneg %p82
        %p266 = pneg %p79
        %p267 = pneg %p103
        %p268 = pneg %p100
        %p269 = pneg %p124
        %p270 = pneg %p121
        %p271 = pneg %p145
        %p272 = pneg %p142
        %p273 = pneg %p166
        %p274 = pneg %p163
        %p275 = pneg %p192
        %p276 = pneg %p189
        %p277 = scmp.lt.s32.totalorder %s19, 1
        %s278 = scalar_select %p277, %s19, 1
        %s279 = smul.addr %s278, 8
        %s280 = scalar_lea.vmem %s7, %s279
        %p281 = scmp.lt.s32.totalorder %s19, 1
        %s282 = scalar_select %p281, %s19, 1
        %s283 = smul.addr %s282, 4
        %s284 = scalar_lea.vmem %s0, %s283
        %p285 = scmp.lt.s32.totalorder %s19, 1
        %s286 = scalar_select %p285, %s19, 1
        %s287 = smul.addr %s286, 8
        %s288 = scalar_lea.vmem %s7, %s287
        %v290 = vld [vmem:[%s284] sm:$0xf]
        %v291 = vld [vmem:[%s1] sm:$0xf]
        %v292 = vld [vmem:[%s1 + $0x4] sm:$0xf]
        %v293 = vld [vmem:[%s1 + $0x8] sm:$0xf]
        %v294 = vld [vmem:[%s1 + $0xc] sm:$0xf]
        %v295 = vld [vmem:[%s2] sm:$0x1]
        %v297 = vlaneseq
        %v298 = vshrl.u32 %v297, 7
        %v299 = vsub.s32 0, %v298
        %v300 = vrot.slane %v295, %v299
        %v306 = vunpack.c.l.b16 %v291
        %v307 = vunpack.c.l.b16 %v292
        %v308 = vunpack.c.l.b16 %v293
        %v309 = vunpack.c.l.b16 %v294
        %v310 = vpack.c.b16 %v307, %v306
        %v311 = vpack.c.b16 %v309, %v308
        %vm314 = vcmask 261120
        %v316 = vsel %vm314, %v290, 0
        %318 = vmatprep.subr.bf16.mxu0 0
        %319 = vmatpush1.bf16.msra.mxu0 %v310
        %320 = vmatprep.subr.bf16.mxu0 0
        %321 = vmatpush1.bf16.msra.mxu0 %v311
        %322 = vmatprep.subr.bf16.mxu0 0
        %323 = vmatpush1.bf16.msra.mxu0 0
        %324 = vmatprep.subr.bf16.mxu0 0
        %325 = vmatpush1.bf16.msra.mxu0 0
        %326 = vmatprep.subr.bf16.mxu0 0
        %327 = vmatpush1.bf16.msra.mxu0 0
        %328 = vmatprep.subr.bf16.mxu0 0
        %329 = vmatpush1.bf16.msra.mxu0 0
        %330 = vmatprep.subr.bf16.mxu0 0
        %331 = vmatpush1.bf16.msra.mxu0 0
        %332 = vmatprep.subr.bf16.mxu0 0
        %333 = vmatpush1.bf16.msra.mxu0 0
        %334 = vmatprep.subr.bf16.mxu0 0
        %335 = vmatpush1.bf16.msra.mxu0 0
        %336 = vmatprep.subr.bf16.mxu0 0
        %337 = vmatpush1.bf16.msra.mxu0 0
        %338 = vmatprep.subr.bf16.mxu0 0
        %339 = vmatpush1.bf16.msra.mxu0 0
        %340 = vmatprep.subr.bf16.mxu0 0
        %341 = vmatpush1.bf16.msra.mxu0 0
        %342 = vmatprep.subr.bf16.mxu0 0
        %343 = vmatpush1.bf16.msra.mxu0 0
        %344 = vmatprep.subr.bf16.mxu0 0
        %345 = vmatpush1.bf16.msra.mxu0 0
        %346 = vmatprep.subr.bf16.mxu0 0
        %347 = vmatpush1.bf16.msra.mxu0 0
        %348 = vmatprep.subr.bf16.mxu0 0
        %349 = vmatpush1.bf16.msra.mxu0 0
        %350 = vmatprep.mubr.bf16.mxu0 0
        %351 = vmatmul.mubr.bf16.gmra.mrb[0].mxu0 %v316
        %v352 = vpop.f32.mrb[0].mxu0
        %v353 = vadd.f32 %v300, %v352
        %v354 = vpop.f32.mrb[0].mxu0
        %v355 = vpop.f32.mrb[0].mxu0
        %v356 = vpop.f32.mrb[0].mxu0
        %357 = vdwg.mxu0
        %v358 = vmax.f32 %v353, 0.0
        %v359 = vpack.c.bf16 %v358, %v358
        %v360 = vld [vmem:[%s3] sm:$0xf]
        %v361 = vld [vmem:[%s3 + $0x4] sm:$0xf]
        %v362 = vld [vmem:[%s3 + $0x8] sm:$0xf]
        %v363 = vld [vmem:[%s3 + $0xc] sm:$0xf]
        %v364 = vld [vmem:[%s4] sm:$0x1]
        %v366 = vlaneseq
        %v367 = vshrl.u32 %v366, 7
        %v368 = vsub.s32 0, %v367
        %v369 = vrot.slane %v364, %v368
        %v375 = vunpack.c.l.b16 %v360
        %v376 = vunpack.c.l.b16 %v361
        %v377 = vunpack.c.l.b16 %v362
        %v378 = vunpack.c.l.b16 %v363
        %v379 = vpack.c.b16 %v376, %v375
        %v380 = vpack.c.b16 %v378, %v377
        %v384 = vsel %vm314, %v359, 0
        %386 = vmatprep.subr.bf16.mxu0 0
        %387 = vmatpush1.bf16.msra.mxu0 %v379
        %388 = vmatprep.subr.bf16.mxu0 0
        %389 = vmatpush1.bf16.msra.mxu0 %v380
        %390 = vmatprep.subr.bf16.mxu0 0
        %391 = vmatpush1.bf16.msra.mxu0 0
        %392 = vmatprep.subr.bf16.mxu0 0
        %393 = vmatpush1.bf16.msra.mxu0 0
        %394 = vmatprep.subr.bf16.mxu0 0
        %395 = vmatpush1.bf16.msra.mxu0 0
        %396 = vmatprep.subr.bf16.mxu0 0
        %397 = vmatpush1.bf16.msra.mxu0 0
        %398 = vmatprep.subr.bf16.mxu0 0
        %399 = vmatpush1.bf16.msra.mxu0 0
        %400 = vmatprep.subr.bf16.mxu0 0
        %401 = vmatpush1.bf16.msra.mxu0 0
        %402 = vmatprep.subr.bf16.mxu0 0
        %403 = vmatpush1.bf16.msra.mxu0 0
        %404 = vmatprep.subr.bf16.mxu0 0
        %405 = vmatpush1.bf16.msra.mxu0 0
        %406 = vmatprep.subr.bf16.mxu0 0
        %407 = vmatpush1.bf16.msra.mxu0 0
        %408 = vmatprep.subr.bf16.mxu0 0
        %409 = vmatpush1.bf16.msra.mxu0 0
        %410 = vmatprep.subr.bf16.mxu0 0
        %411 = vmatpush1.bf16.msra.mxu0 0
        %412 = vmatprep.subr.bf16.mxu0 0
        %413 = vmatpush1.bf16.msra.mxu0 0
        %414 = vmatprep.subr.bf16.mxu0 0
        %415 = vmatpush1.bf16.msra.mxu0 0
        %416 = vmatprep.subr.bf16.mxu0 0
        %417 = vmatpush1.bf16.msra.mxu0 0
        %418 = vmatprep.mubr.bf16.mxu0 0
        %419 = vmatmul.mubr.bf16.gmra.mrb[0].mxu0 %v384
        %v420 = vpop.f32.mrb[0].mxu0
        %v421 = vadd.f32 %v369, %v420
        %v422 = vpop.f32.mrb[0].mxu0
        %v423 = vpop.f32.mrb[0].mxu0
        %v424 = vpop.f32.mrb[0].mxu0
        %425 = vdwg.mxu0
        %v426 = vmax.f32 %v421, 0.0
        %v427 = vpack.c.bf16 %v426, %v426
        %v428 = vld [vmem:[#allocation2] sm:$0xf]
        %v429 = vld [vmem:[#allocation2 + $0x4] sm:$0xf]
        %v430 = vld [vmem:[#allocation2 + $0x8] sm:$0xf]
        %v431 = vld [vmem:[#allocation2 + $0xc] sm:$0xf]
        %v436 = vunpack.c.l.b16 %v428
        %v437 = vunpack.c.l.b16 %v429
        %v438 = vunpack.c.l.b16 %v430
        %v439 = vunpack.c.l.b16 %v431
        %v440 = vpack.c.b16 %v437, %v436
        %v441 = vpack.c.b16 %v439, %v438
        %v445 = vsel %vm314, %v427, 0
        %447 = vmatprep.subr.bf16.mxu0 0
        %448 = vmatpush1.bf16.msra.mxu0 %v440
        %449 = vmatprep.subr.bf16.mxu0 0
        %450 = vmatpush1.bf16.msra.mxu0 %v441
        %451 = vmatprep.subr.bf16.mxu0 0
        %452 = vmatpush1.bf16.msra.mxu0 0
        %453 = vmatprep.subr.bf16.mxu0 0
        %454 = vmatpush1.bf16.msra.mxu0 0
        %455 = vmatprep.subr.bf16.mxu0 0
        %456 = vmatpush1.bf16.msra.mxu0 0
        %457 = vmatprep.subr.bf16.mxu0 0
        %458 = vmatpush1.bf16.msra.mxu0 0
        %459 = vmatprep.subr.bf16.mxu0 0
        %460 = vmatpush1.bf16.msra.mxu0 0
        %461 = vmatprep.subr.bf16.mxu0 0
        %462 = vmatpush1.bf16.msra.mxu0 0
        %463 = vmatprep.subr.bf16.mxu0 0
        %464 = vmatpush1.bf16.msra.mxu0 0
        %465 = vmatprep.subr.bf16.mxu0 0
        %466 = vmatpush1.bf16.msra.mxu0 0
        %467 = vmatprep.subr.bf16.mxu0 0
        %468 = vmatpush1.bf16.msra.mxu0 0
        %469 = vmatprep.subr.bf16.mxu0 0
        %470 = vmatpush1.bf16.msra.mxu0 0
        %471 = vmatprep.subr.bf16.mxu0 0
        %472 = vmatpush1.bf16.msra.mxu0 0
        %473 = vmatprep.subr.bf16.mxu0 0
        %474 = vmatpush1.bf16.msra.mxu0 0
        %475 = vmatprep.subr.bf16.mxu0 0
        %476 = vmatpush1.bf16.msra.mxu0 0
        %477 = vmatprep.subr.bf16.mxu0 0
        %478 = vmatpush1.bf16.msra.mxu0 0
        %479 = vmatprep.mubr.bf16.mxu0 0
        %480 = vmatmul.mubr.bf16.gmra.mrb[0].mxu0 %v445
        %v481 = vpop.f32.mrb[0].mxu0
        %v482 = vadd.f32 0.0, %v481
        %v483 = vpop.f32.mrb[0].mxu0
        %v484 = vpop.f32.mrb[0].mxu0
        %v485 = vpop.f32.mrb[0].mxu0
        %486 = vdwg.mxu0
        %v487 = vld [vmem:[%s6] sm:$0x1]
        %v489 = vlaneseq
        %v490 = vshrl.u32 %v489, 7
        %v491 = vsub.s32 0, %v490
        %v492 = vrot.slane %v487, %v491
        %v494 = vadd.f32 %v482, %v492
        %v495 = vxor.u32 %v494, 2147483648
        %v496 = vmul.f32 %v495, 1.442695
        %v497 = vpow.pop %v496
        %v498 = vadd.f32 %v497, 1.0
        %v499 = vrcp.pop %v498
        %v500 = vmul.f32 1.0, %v499
        %vm501 = vcmask 15360
        %502 = vst.msk [vmem:[%s288] sm:$0xff] %vm501, %v500
        %p503 = scmp.lt.s32.totalorder %s19, 1
        %s504 = scalar_select %p503, %s19, 1
        %s505 = smul.addr %s504, 8
        %s506 = scalar_lea.vmem %s7, %s505
        // Predicated region
        $region53: #{dhm_regression_head.1} parent=47 // pred_check
          %p507 = pneg %p189
        $region54: #{dhm_regression_head.1} parent=47 // pred_check_branch
          %509 = sbr.rel (%p507) target = $region56
        $region55: #{dhm_regression_head.1} parent=47 // pred_region
          _
        $region56: #{dhm_regression_head.1} parent=47 // pred_fallthru
          _
      $region48: #{dhm_regression_head.1} parent=5 // pred_fallthru
        _
      %p510 = scmp.le.s32.totalorder 2, %s14
      // Predicated region
      $region57: #{dhm_regression_head.1} parent=5 // pred_check
        %p511 = pneg %p510
      $region58: #{dhm_regression_head.1} parent=5 // pred_check_branch
        %513 = sbr.rel (%p511) target = $region60
      $region59: #{dhm_regression_head.1} parent=5 // pred_region
        %s514 = ssub.s32 %s14, 2
        // Predicated region
        $region61: #{dhm_regression_head.1} parent=59 // pred_check
          %p515 = pneg %p195
        $region62: #{dhm_regression_head.1} parent=59 // pred_check_branch
          %517 = sbr.rel (%p515) target = $region64
        $region63: #{dhm_regression_head.1} parent=59 // pred_region
          %p518 = scmp.lt.s32.totalorder %s20, 1
          %s519 = scalar_select %p518, %s20, 1
          %s520 = smul.addr %s519, 8
          %s521 = scalar_lea.vmem %s7, %s520
        $region64: #{dhm_regression_head.1} parent=59 // pred_fallthru
          _
      $region60: #{dhm_regression_head.1} parent=5 // pred_fallthru
        _
    $region6: #{dhm_regression_head.1} parent=1 // loop_footer
      %s18 = sadd.s32 1, %s14
    $region7: #{dhm_regression_head.1} parent=1 // loop_footer_branch
      %13 = sbr.rel target = $region3
    $region8: #{dhm_regression_head.1} parent=1 // loop_exit
      _
    %522 = vsyncpa [#allocation3], 1
    %s523 = scalar_lea.sflag [#allocation3], 1
    %524 = vsyncpa %s523, 1

</llo_original>
